<compile_context>
chip_gen: v6e
topology: v6e:2x2x1
jax: 0.10.0
libtpu: 0.0.40
codegen_flags: <defaults>
</compile_context>

<pallas_src>
import functools
import math

import jax
import jax.numpy as jnp
from jax.experimental import pallas as pl
from jax.experimental.pallas import tpu as pltpu

LANE = 128
SUBLANE = 8


def _round_up(x, m):
    return ((x + m - 1) // m) * m


def _vmem_capacity_bytes():
    """Physical VMEM per core; conservative fallback = v7x's 64 MiB."""
    try:
        return int(pltpu.get_tpu_info().vmem_capacity_bytes)
    except Exception:
        return 64 << 20


# ---------------------------------------------------------------------------
# Kernels
# ---------------------------------------------------------------------------
def _bow_single_kernel(x_ref, w_ref, b_ref, o_ref):
    """Fast path: whole problem VMEM-resident, single step, no grid."""
    z = jnp.dot(x_ref[...], w_ref[...], preferred_element_type=jnp.float32)
    o_ref[...] = jax.nn.sigmoid(z + b_ref[...])


def _bow_tiled_kernel(x_ref, w_ref, b_ref, o_ref, *, resident_w, tk):
    """Tiled path over grid = (batch tiles, vocab tiles).

    The output block index ignores k, so o_ref (f32) stays VMEM-resident
    across the vocab axis and doubles as the accumulator (no scratch).
    """
    k = pl.program_id(1)

    @pl.when(k == 0)
    def _():
        o_ref[...] = jnp.zeros_like(o_ref)

    if resident_w:
        # Whole W^T lives in VMEM (fetched from HBM once); slice this k tile.
        off = pl.multiple_of(k * tk, tk)
        w_tile = w_ref[pl.ds(off, tk), :]
    else:
        w_tile = w_ref[...]

    o_ref[...] += jnp.dot(x_ref[...], w_tile,
                          preferred_element_type=jnp.float32)

    @pl.when(k == pl.num_programs(1) - 1)
    def _():
        o_ref[...] = jax.nn.sigmoid(o_ref[...] + b_ref[...])


# ---------------------------------------------------------------------------
# Wrappers
# ---------------------------------------------------------------------------
def prepare_params(weight, bias, *, compute_dtype=jnp.float32):
    """One-time parameter prep (hoisted out of the per-call path).

    weight: PyTorch nn.Linear layout (L, V)  ->  W^T (V, L), MXU-friendly.
    bias:   (L,)                             ->  (1, L) f32 (epilogue dtype).
    """
    wt = jnp.asarray(weight).T.astype(compute_dtype)       # (V, L)
    b2 = jnp.asarray(bias, jnp.float32).reshape(1, -1)     # (1, L)
    return wt, b2


def bow_forward(bow_vec, wt, b2, *, tm=128, tk=2048, force_tiled=False,
                _force_stream_w=False):
    """sigmoid(bow_vec @ W^T + b).  bow_vec (B, V) f32; wt (V, L); b2 (1, L)."""
    B, V = bow_vec.shape
    Vw, L = wt.shape
    assert Vw == V and b2.shape == (1, L)

    x = bow_vec.astype(wt.dtype)
    vmem_cap = _vmem_capacity_bytes()
    itemsize = jnp.dtype(wt.dtype).itemsize
    vmem_limit = min(int(vmem_cap * 0.75), 96 << 20)

    # ---- Fast path: one VMEM-resident step ------------------------------
    total_bytes = (B * V + V * L) * itemsize + (B * L + L) * 4
    if not force_tiled and 2 * total_bytes <= min(16 << 20, vmem_cap // 4):
        return pl.pallas_call(
            _bow_single_kernel,
            out_shape=jax.ShapeDtypeStruct((B, L), jnp.float32),
            in_specs=[
                pl.BlockSpec(memory_space=pltpu.MemorySpace.VMEM),  # x
                pl.BlockSpec(memory_space=pltpu.MemorySpace.VMEM),  # W^T
                pl.BlockSpec(memory_space=pltpu.MemorySpace.VMEM),  # bias
            ],
            out_specs=pl.BlockSpec(memory_space=pltpu.MemorySpace.VMEM),
            compiler_params=pltpu.CompilerParams(
                vmem_limit_bytes=vmem_limit),
        )(x, wt, b2)

    # ---- Tiled path ------------------------------------------------------
    # Vocab tiles: aim for `tk`, then shrink to minimize ragged padding.
    nk = max(1, math.ceil(V / tk))
    tk = _round_up(math.ceil(V / nk), LANE)
    Vp = nk * tk

    # Keep W^T fully VMEM-resident when it fits the per-generation budget.
    w_bytes = Vp * L * itemsize
    resident_w = (not _force_stream_w) and (2 * w_bytes <= int(0.35 * vmem_cap))

    # Batch tiles; when W is resident and there would be a single batch tile,
    # split into two so megacore "parallel" sharding has work for both cores.
    nm = max(1, math.ceil(B / tm))
    if resident_w and nm == 1 and B >= 2 * SUBLANE:
        nm = 2
    tm = _round_up(math.ceil(B / nm), SUBLANE)
    Bm = nm * tm

    # Pad only ragged tails (no full zero-copy when shapes already divide).
    if (Bm, Vp) != (B, V):
        x = jnp.pad(x, ((0, Bm - B), (0, Vp - V)))
    if Vp != V:
        wt = jnp.pad(wt, ((0, Vp - V), (0, 0)))

    if resident_w:
        w_spec = pl.BlockSpec((Vp, L), lambda i, k: (0, 0))   # resident, 1 DMA
    else:
        w_spec = pl.BlockSpec((tk, L), lambda i, k: (k, 0))   # streamed tiles

    kernel = functools.partial(_bow_tiled_kernel, resident_w=resident_w, tk=tk)

    out = pl.pallas_call(
        kernel,
        out_shape=jax.ShapeDtypeStruct((Bm, L), jnp.float32),
        grid_spec=pltpu.PrefetchScalarGridSpec(
            num_scalar_prefetch=0,
            grid=(nm, nk),
            in_specs=[
                pl.BlockSpec((tm, tk), lambda i, k: (i, k)),   # x tile
                w_spec,                                        # W^T
                pl.BlockSpec((1, L), lambda i, k: (0, 0)),     # bias (resident)
            ],
            out_specs=pl.BlockSpec((tm, L), lambda i, k: (i, 0)),
        ),
        compiler_params=pltpu.CompilerParams(
            dimension_semantics=("parallel", "arbitrary"),
            vmem_limit_bytes=vmem_limit,
        ),
    )(x, wt, b2)

    return out[:B]


if __name__ == "__main__":
    key = jax.random.PRNGKey(0)
    k_x, k_w, k_b, k_x2 = jax.random.split(key, 4)

    batch, vocab_size, num_labels = 16, 384, 5

    # Deterministic synthetic nn.Linear parameters: W (L, V), b (L,).
    bound = 1.0 / math.sqrt(vocab_size)
    weight = jax.random.uniform(
        k_w, (num_labels, vocab_size), minval=-bound, maxval=bound,
        dtype=jnp.float32)
    bias = jax.random.uniform(
        k_b, (num_labels,), minval=-bound, maxval=bound, dtype=jnp.float32)

    # Synthetic bag-of-words counts.
    bow_vec = jax.random.randint(
        k_x, (batch, vocab_size), 0, 5).astype(jnp.float32)

    ref = jax.nn.sigmoid(bow_vec @ weight.T + bias)

    # 1) Fast path (single VMEM-resident step), f32, exact tolerance.
    wt, b2 = prepare_params(weight, bias)
    out = jax.block_until_ready(bow_forward(bow_vec, wt, b2))
    assert out.shape == (batch, num_labels)
    assert jnp.allclose(out, ref, atol=1e-5), "fast path mismatch"

    # 2) Tiled path: batch x vocab grid, resident W^T, o_ref accumulation.
    out_t = jax.block_until_ready(
        bow_forward(bow_vec, wt, b2, tm=8, tk=128, force_tiled=True))
    assert jnp.allclose(out_t, ref, atol=1e-5), "tiled path mismatch"

    # 3) Ragged shapes + streamed-weight branch (pad-only-the-tail logic).
    b3, v3 = 10, 300
    x3 = jax.random.randint(k_x2, (b3, v3), 0, 5).astype(jnp.float32)
    w3 = weight[:, :v3]
    ref3 = jax.nn.sigmoid(x3 @ w3.T + bias)
    wt3, b23 = prepare_params(w3, bias)
    out3 = jax.block_until_ready(
        bow_forward(x3, wt3, b23, tm=8, tk=128, force_tiled=True,
                    _force_stream_w=True))
    assert jnp.allclose(out3, ref3, atol=1e-5), "ragged/streamed mismatch"

    # 4) bf16 inputs (production HBM-traffic saving), f32 accumulation.
    b4 = 32
    x4 = jax.random.randint(k_x2, (b4, vocab_size), 0, 5).astype(jnp.float32)
    ref4 = jax.nn.sigmoid(x4 @ weight.T + bias)
    wt_bf, b2_bf = prepare_params(weight, bias, compute_dtype=jnp.bfloat16)
    out4 = jax.block_until_ready(
        bow_forward(x4, wt_bf, b2_bf, tm=16, tk=128, force_tiled=True))
    assert jnp.allclose(out4, ref4, atol=2e-2), "bf16 path mismatch"

    print("KERNEL_OK")
</pallas_src>

<mosaic_0001>
module attributes {stable_mosaic.version = 11 : i64} {
  func.func @_bow_single_kernel(%arg0: memref<16x384xf32, #tpu.memory_space<vmem>>, %arg1: memref<384x5xf32, #tpu.memory_space<vmem>>, %arg2: memref<1x5xf32, #tpu.memory_space<vmem>>, %arg3: memref<16x5xf32, #tpu.memory_space<vmem>>) attributes {dimension_semantics = [], scalar_prefetch = 0 : i64, scratch_operands = 0 : i64, tpu.core_type = #tpu.core_type<tc>} {
    %c0 = arith.constant 0 : index
    %c0_0 = arith.constant 0 : index
    %0 = vector.load %arg0[%c0, %c0_0] : memref<16x384xf32, #tpu.memory_space<vmem>>, vector<16x384xf32>
    %c0_1 = arith.constant 0 : index
    %c0_2 = arith.constant 0 : index
    %1 = vector.load %arg1[%c0_1, %c0_2] : memref<384x5xf32, #tpu.memory_space<vmem>>, vector<384x5xf32>
    %cst = arith.constant dense<0.000000e+00> : vector<16x5xf32>
    %2 = tpu.matmul %0, %1, %cst {dimension_numbers = #tpu.dot_dimension_numbers<[1], [0], [0], [1], [0, 0, 1, 1], [], []>} : vector<16x384xf32>, vector<384x5xf32>, vector<16x5xf32> -> vector<16x5xf32>
    %c0_3 = arith.constant 0 : index
    %c0_4 = arith.constant 0 : index
    %3 = vector.load %arg2[%c0_3, %c0_4] : memref<1x5xf32, #tpu.memory_space<vmem>>, vector<1x5xf32>
    %4 = vector.broadcast %3 : vector<1x5xf32> to vector<16x5xf32>
    %5 = arith.addf %2, %4 : vector<16x5xf32>
    %6 = arith.negf %5 : vector<16x5xf32>
    %7 = math.exp %6 : vector<16x5xf32>
    %cst_5 = arith.constant 1.000000e+00 : f32
    %8 = vector.broadcast %cst_5 : f32 to vector<16x5xf32>
    %9 = arith.addf %8, %7 : vector<16x5xf32>
    %10 = arith.divf %8, %9 : vector<16x5xf32>
    %c0_6 = arith.constant 0 : index
    %c0_7 = arith.constant 0 : index
    %11 = vector.load %arg3[%c0_6, %c0_7] : memref<16x5xf32, #tpu.memory_space<vmem>>, vector<16x5xf32>
    tpu.vector_store %arg3[%c0_6, %c0_7], %10 {strides = array<i32>} : memref<16x5xf32, #tpu.memory_space<vmem>>, vector<16x5xf32>,
    return
  }
}

</mosaic_0001>

<llo_original>
// kernel: tpu_custom_call.1
$region0: #{tpu_custom_call.1}
  #allocation0 [shape = 'u32[]', space=smem, size = 0x4, offset = 0x4, fixed_abs, tag = 'smem constant byte address 0x4 - core index']
  #allocation1 [shape = 'u32[144,128]{1,0:T(1,128)}', space=vmem, size = 0x12000, scoped, tag = 'internal scratch']
  %s0 = inlined_call_operand.vmem [shape: f32[16,384], index: 0, kind: input, shape index: {}]
  %s1 = inlined_call_operand.vmem [shape: f32[384,5], index: 1, kind: input, shape index: {}]
  %s2 = inlined_call_operand.vmem [shape: f32[1,5], index: 2, kind: input, shape index: {}]
  %s3 = inlined_call_operand.vmem [shape: f32[16,5], index: 3, kind: output, shape index: {}]
  %s4 = sld [smem:[#allocation0]]
  $region22: #{tpu_custom_call.1} parent=0
    _
  %s6 = ssub.s32 1, %s4
  %s7 = scalar_select 0, %s6, %s4
  // Predicated region
  $region2: #{tpu_custom_call.1} parent=0 // pred_check
    _
  $region3: #{tpu_custom_call.1} parent=0 // pred_check_branch
    %9 = sbr.rel (0) target = $region5
  $region4: #{tpu_custom_call.1} parent=0 // pred_region
    _
  $region5: #{tpu_custom_call.1} parent=0 // pred_fallthru
    _
  // Predicated region
  $region6: #{tpu_custom_call.1} parent=0 // pred_check
    _
  $region7: #{tpu_custom_call.1} parent=0 // pred_check_branch
    %11 = sbr.rel (0) target = $region9
  $region8: #{tpu_custom_call.1} parent=0 // pred_region
    _
  $region9: #{tpu_custom_call.1} parent=0 // pred_fallthru
    _
  // Predicated region
  $region10: #{tpu_custom_call.1} parent=0 // pred_check
    _
  $region11: #{tpu_custom_call.1} parent=0 // pred_check_branch
    %13 = sbr.rel (0) target = $region13
  $region12: #{tpu_custom_call.1} parent=0 // pred_region
    _
  $region13: #{tpu_custom_call.1} parent=0 // pred_fallthru
    _
  %v14 = vld [vmem:[%s0] sm:$0xff]
  %v15 = vld [vmem:[%s0 + $0x8] sm:$0xff]
  %v16 = vld [vmem:[%s0 + $0x10] sm:$0xff]
  %v17 = vld [vmem:[%s0 + $0x18] sm:$0xff]
  %v18 = vld [vmem:[%s0 + $0x20] sm:$0xff]
  %v19 = vld [vmem:[%s0 + $0x28] sm:$0xff]
  %v20 = vld [vmem:[%s1] sm:$0xff]
  %v21 = vld [vmem:[%s1 + $0x8] sm:$0xff]
  %v22 = vld [vmem:[%s1 + $0x10] sm:$0xff]
  %v23 = vld [vmem:[%s1 + $0x18] sm:$0xff]
  %v24 = vld [vmem:[%s1 + $0x20] sm:$0xff]
  %v25 = vld [vmem:[%s1 + $0x28] sm:$0xff]
  %v26 = vld [vmem:[%s1 + $0x30] sm:$0xff]
  %v27 = vld [vmem:[%s1 + $0x38] sm:$0xff]
  %v28 = vld [vmem:[%s1 + $0x40] sm:$0xff]
  %v29 = vld [vmem:[%s1 + $0x48] sm:$0xff]
  %v30 = vld [vmem:[%s1 + $0x50] sm:$0xff]
  %v31 = vld [vmem:[%s1 + $0x58] sm:$0xff]
  %v32 = vld [vmem:[%s1 + $0x60] sm:$0xff]
  %v33 = vld [vmem:[%s1 + $0x68] sm:$0xff]
  %v34 = vld [vmem:[%s1 + $0x70] sm:$0xff]
  %v35 = vld [vmem:[%s1 + $0x78] sm:$0xff]
  %v36 = vld [vmem:[%s1 + $0x80] sm:$0xff]
  %v37 = vld [vmem:[%s1 + $0x88] sm:$0xff]
  %v38 = vld [vmem:[%s1 + $0x90] sm:$0xff]
  %v39 = vld [vmem:[%s1 + $0x98] sm:$0xff]
  %v40 = vld [vmem:[%s1 + $0xa0] sm:$0xff]
  %v41 = vld [vmem:[%s1 + $0xa8] sm:$0xff]
  %v42 = vld [vmem:[%s1 + $0xb0] sm:$0xff]
  %v43 = vld [vmem:[%s1 + $0xb8] sm:$0xff]
  %v44 = vld [vmem:[%s1 + $0xc0] sm:$0xff]
  %v45 = vld [vmem:[%s1 + $0xc8] sm:$0xff]
  %v46 = vld [vmem:[%s1 + $0xd0] sm:$0xff]
  %v47 = vld [vmem:[%s1 + $0xd8] sm:$0xff]
  %v48 = vld [vmem:[%s1 + $0xe0] sm:$0xff]
  %v49 = vld [vmem:[%s1 + $0xe8] sm:$0xff]
  %v50 = vld [vmem:[%s1 + $0xf0] sm:$0xff]
  %v51 = vld [vmem:[%s1 + $0xf8] sm:$0xff]
  %v52 = vld [vmem:[%s1 + $0x100] sm:$0xff]
  %v53 = vld [vmem:[%s1 + $0x108] sm:$0xff]
  %v54 = vld [vmem:[%s1 + $0x110] sm:$0xff]
  %v55 = vld [vmem:[%s1 + $0x118] sm:$0xff]
  %v56 = vld [vmem:[%s1 + $0x120] sm:$0xff]
  %v57 = vld [vmem:[%s1 + $0x128] sm:$0xff]
  %v58 = vld [vmem:[%s1 + $0x130] sm:$0xff]
  %v59 = vld [vmem:[%s1 + $0x138] sm:$0xff]
  %v60 = vld [vmem:[%s1 + $0x140] sm:$0xff]
  %v61 = vld [vmem:[%s1 + $0x148] sm:$0xff]
  %v62 = vld [vmem:[%s1 + $0x150] sm:$0xff]
  %v63 = vld [vmem:[%s1 + $0x158] sm:$0xff]
  %v64 = vld [vmem:[%s1 + $0x160] sm:$0xff]
  %v65 = vld [vmem:[%s1 + $0x168] sm:$0xff]
  %v66 = vld [vmem:[%s1 + $0x170] sm:$0xff]
  %v67 = vld [vmem:[%s1 + $0x178] sm:$0xff]
  %v68 = vld [vmem:[%s2] sm:$0x1]
  %v70 = vlaneseq
  %v71 = vshrl.u32 %v70, 7
  %v72 = vsub.s32 0, %v71
  %v73 = vrot.slane %v68, %v72
  %75 = vmatprep.subr.mxu0 0.0
  %76 = vmatpush1.msra.mxu0 %v35
  %77 = vmatprep.subr.mxu0 0.0
  %78 = vmatpush1.msra.mxu0 %v34
  %79 = vmatprep.subr.mxu0 0.0
  %80 = vmatpush1.msra.mxu0 %v33
  %81 = vmatprep.subr.mxu0 0.0
  %82 = vmatpush1.msra.mxu0 %v32
  %83 = vmatprep.subr.mxu0 0.0
  %84 = vmatpush1.msra.mxu0 %v31
  %85 = vmatprep.subr.mxu0 0.0
  %86 = vmatpush1.msra.mxu0 %v30
  %87 = vmatprep.subr.mxu0 0.0
  %88 = vmatpush1.msra.mxu0 %v29
  %89 = vmatprep.subr.mxu0 0.0
  %90 = vmatpush1.msra.mxu0 %v28
  %91 = vmatprep.subr.mxu0 0.0
  %92 = vmatpush1.msra.mxu0 %v27
  %93 = vmatprep.subr.mxu0 0.0
  %94 = vmatpush1.msra.mxu0 %v26
  %95 = vmatprep.subr.mxu0 0.0
  %96 = vmatpush1.msra.mxu0 %v25
  %97 = vmatprep.subr.mxu0 0.0
  %98 = vmatpush1.msra.mxu0 %v24
  %99 = vmatprep.subr.mxu0 0.0
  %100 = vmatpush1.msra.mxu0 %v23
  %101 = vmatprep.subr.mxu0 0.0
  %102 = vmatpush1.msra.mxu0 %v22
  %103 = vmatprep.subr.mxu0 0.0
  %104 = vmatpush1.msra.mxu0 %v21
  %105 = vmatprep.subr.mxu0 0.0
  %106 = vmatpush1.msra.mxu0 %v20
  %107 = vmatprep.subr.mxu0 0.0
  %108 = vmatpush2.msra.mxu0 %v51
  %109 = vmatprep.subr.mxu0 0.0
  %110 = vmatpush2.msra.mxu0 %v50
  %111 = vmatprep.subr.mxu0 0.0
  %112 = vmatpush2.msra.mxu0 %v49
  %113 = vmatprep.subr.mxu0 0.0
  %114 = vmatpush2.msra.mxu0 %v48
  %115 = vmatprep.subr.mxu0 0.0
  %116 = vmatpush2.msra.mxu0 %v47
  %117 = vmatprep.subr.mxu0 0.0
  %118 = vmatpush2.msra.mxu0 %v46
  %119 = vmatprep.subr.mxu0 0.0
  %120 = vmatpush2.msra.mxu0 %v45
  %121 = vmatprep.subr.mxu0 0.0
  %122 = vmatpush2.msra.mxu0 %v44
  %123 = vmatprep.subr.mxu0 0.0
  %124 = vmatpush2.msra.mxu0 %v43
  %125 = vmatprep.subr.mxu0 0.0
  %126 = vmatpush2.msra.mxu0 %v42
  %127 = vmatprep.subr.mxu0 0.0
  %128 = vmatpush2.msra.mxu0 %v41
  %129 = vmatprep.subr.mxu0 0.0
  %130 = vmatpush2.msra.mxu0 %v40
  %131 = vmatprep.subr.mxu0 0.0
  %132 = vmatpush2.msra.mxu0 %v39
  %133 = vmatprep.subr.mxu0 0.0
  %134 = vmatpush2.msra.mxu0 %v38
  %135 = vmatprep.subr.mxu0 0.0
  %136 = vmatpush2.msra.mxu0 %v37
  %137 = vmatprep.subr.mxu0 0.0
  %138 = vmatpush2.msra.mxu0 %v36
  %139 = vmatprep.mubr.f32.mxu0 %v15
  %140 = vmatmul.mubr.f32.gmra.mxu0 %v14
  %v141 = vpop.f32.mrf.mxu0
  %v142 = vadd.f32 %v73, %v141
  %v143 = vpop.f32.mrf.mxu0
  %144 = vmatprep.mubr.f32.mxu0 %v18
  %145 = vmatmul.mubr.f32.gmra.mxu0 %v17
  %v146 = vpop.f32.mrf.mxu0
  %v147 = vadd.f32 %v73, %v146
  %v148 = vpop.f32.mrf.mxu0
  %149 = vdwg.mxu0
  %150 = vmatprep.subr.mxu0 0.0
  %151 = vmatpush1.msra.mxu0 %v67
  %152 = vmatprep.subr.mxu0 0.0
  %153 = vmatpush1.msra.mxu0 %v66
  %154 = vmatprep.subr.mxu0 0.0
  %155 = vmatpush1.msra.mxu0 %v65
  %156 = vmatprep.subr.mxu0 0.0
  %157 = vmatpush1.msra.mxu0 %v64
  %158 = vmatprep.subr.mxu0 0.0
  %159 = vmatpush1.msra.mxu0 %v63
  %160 = vmatprep.subr.mxu0 0.0
  %161 = vmatpush1.msra.mxu0 %v62
  %162 = vmatprep.subr.mxu0 0.0
  %163 = vmatpush1.msra.mxu0 %v61
  %164 = vmatprep.subr.mxu0 0.0
  %165 = vmatpush1.msra.mxu0 %v60
  %166 = vmatprep.subr.mxu0 0.0
  %167 = vmatpush1.msra.mxu0 %v59
  %168 = vmatprep.subr.mxu0 0.0
  %169 = vmatpush1.msra.mxu0 %v58
  %170 = vmatprep.subr.mxu0 0.0
  %171 = vmatpush1.msra.mxu0 %v57
  %172 = vmatprep.subr.mxu0 0.0
  %173 = vmatpush1.msra.mxu0 %v56
  %174 = vmatprep.subr.mxu0 0.0
  %175 = vmatpush1.msra.mxu0 %v55
  %176 = vmatprep.subr.mxu0 0.0
  %177 = vmatpush1.msra.mxu0 %v54
  %178 = vmatprep.subr.mxu0 0.0
  %179 = vmatpush1.msra.mxu0 %v53
  %180 = vmatprep.subr.mxu0 0.0
  %181 = vmatpush1.msra.mxu0 %v52
  %182 = vmatprep.subr.mxu0 0.0
  %183 = vmatpush2.msra.mxu0 0.0
  %184 = vmatprep.subr.mxu0 0.0
  %185 = vmatpush2.msra.mxu0 0.0
  %186 = vmatprep.subr.mxu0 0.0
  %187 = vmatpush2.msra.mxu0 0.0
  %188 = vmatprep.subr.mxu0 0.0
  %189 = vmatpush2.msra.mxu0 0.0
  %190 = vmatprep.subr.mxu0 0.0
  %191 = vmatpush2.msra.mxu0 0.0
  %192 = vmatprep.subr.mxu0 0.0
  %193 = vmatpush2.msra.mxu0 0.0
  %194 = vmatprep.subr.mxu0 0.0
  %195 = vmatpush2.msra.mxu0 0.0
  %196 = vmatprep.subr.mxu0 0.0
  %197 = vmatpush2.msra.mxu0 0.0
  %198 = vmatprep.subr.mxu0 0.0
  %199 = vmatpush2.msra.mxu0 0.0
  %200 = vmatprep.subr.mxu0 0.0
  %201 = vmatpush2.msra.mxu0 0.0
  %202 = vmatprep.subr.mxu0 0.0
  %203 = vmatpush2.msra.mxu0 0.0
  %204 = vmatprep.subr.mxu0 0.0
  %205 = vmatpush2.msra.mxu0 0.0
  %206 = vmatprep.subr.mxu0 0.0
  %207 = vmatpush2.msra.mxu0 0.0
  %208 = vmatprep.subr.mxu0 0.0
  %209 = vmatpush2.msra.mxu0 0.0
  %210 = vmatprep.subr.mxu0 0.0
  %211 = vmatpush2.msra.mxu0 0.0
  %212 = vmatprep.subr.mxu0 0.0
  %213 = vmatpush2.msra.mxu0 0.0
  %214 = vmatprep.mubr.f32.mxu0 0.0
  %215 = vmatmul.mubr.f32.gmra.mxu0 %v16
  %v216 = vpop.f32.mrf.mxu0
  %v217 = vadd.f32 %v142, %v216
  %v218 = vpop.f32.mrf.mxu0
  %219 = vmatprep.mubr.f32.mxu0 0.0
  %220 = vmatmul.mubr.f32.gmra.mxu0 %v19
  %v221 = vpop.f32.mrf.mxu0
  %v222 = vadd.f32 %v147, %v221
  %v223 = vpop.f32.mrf.mxu0
  %224 = vdwg.mxu0
  %v225 = vxor.u32 %v217, 2147483648
  %v226 = vxor.u32 %v222, 2147483648
  %v227 = vmul.f32 %v225, 1.442695
  %v228 = vpow.pop %v227
  %v229 = vmul.f32 %v226, 1.442695
  %v230 = vpow.pop %v229
  %v231 = vadd.f32 %v228, 1.0
  %v232 = vadd.f32 %v230, 1.0
  %v233 = vrcp.pop %v231
  %v234 = vmul.f32 1.0, %v233
  %v235 = vrcp.pop %v232
  %v236 = vmul.f32 1.0, %v235
  %vm237 = vcmask 39936
  %238 = vst.msk [vmem:[%s3] sm:$0xff] %vm237, %v234
  %239 = vst.msk [vmem:[%s3 + $0x8] sm:$0xff] %vm237, %v236
  // Predicated region
  $region14: #{tpu_custom_call.1} parent=0 // pred_check
    _
  $region15: #{tpu_custom_call.1} parent=0 // pred_check_branch
    %241 = sbr.rel (0) target = $region17
  $region16: #{tpu_custom_call.1} parent=0 // pred_region
    _
  $region17: #{tpu_custom_call.1} parent=0 // pred_fallthru
    _
  // Predicated region
  $region18: #{tpu_custom_call.1} parent=0 // pred_check
    _
  $region19: #{tpu_custom_call.1} parent=0 // pred_check_branch
    %243 = sbr.rel (0) target = $region21
  $region20: #{tpu_custom_call.1} parent=0 // pred_region
    _
  $region21: #{tpu_custom_call.1} parent=0 // pred_fallthru
    _

</llo_original>
